<compile_context>
chip_gen: v7x
topology: tpu7x:2x2x1
jax: 0.10.0
libtpu: 0.0.40
codegen_flags: <defaults>
</compile_context>

<pallas_src>
import numpy as np
import jax
import jax.numpy as jnp
from jax import lax
from jax.experimental import pallas as pl
from jax.experimental.pallas import tpu as pltpu

# ------------------- small, module-consistent configuration ------------------
N = 2            # batch
C_IN = 4         # in_channels
H = W = 16       # image size
P = 4            # patch_size
HIDDEN = 128     # hidden_size (kept lane-dense: multiple of 128)
NPH, NPW = H // P, W // P
N_PATCH = NPH * NPW              # 16 patches per image
PATCH_DIM = C_IN * P * P         # 64 = flattened patch length
DROPOUT_RATE = 0.1               # eval mode -> identity


# ----------------------------- Pallas kernel ---------------------------------
def _embed_kernel(patches_ref, w_ref, add_ref, out_ref):
    # patches_ref: (N*N_PATCH, PATCH_DIM) = (32, 64)   im2col'ed patches (whole batch)
    # w_ref:       (PATCH_DIM, HIDDEN)    = (64, 128)  reshaped conv weight
    # add_ref:     (N*N_PATCH, HIDDEN)    = (32, 128)  conv bias + position embeddings
    # out_ref:     (N*N_PATCH, HIDDEN)    = (32, 128)
    out_ref[...] = (
        jnp.dot(patches_ref[...], w_ref[...], preferred_element_type=jnp.float32)
        + add_ref[...]
    )


@jax.jit
def embeddings_forward(x_nchw, w_conv, b_conv, pos_emb):
    """x_nchw: (N, C_IN, H, W) -> embeddings (N, N_PATCH, HIDDEN)."""
    n, c, h, w = x_nchw.shape
    # im2col for a non-overlapping PxP / stride-P conv is a pure reshape+transpose;
    # patch flattening order is (c, pr, pc) to match the OIHW weight flatten below.
    patches = x_nchw.reshape(n, c, NPH, P, NPW, P)
    patches = patches.transpose(0, 2, 4, 1, 3, 5)          # (N, nph, npw, C, P, P)
    patches = patches.reshape(n * N_PATCH, PATCH_DIM)      # (N*n_patches, C*P*P)

    w_mat = w_conv.reshape(HIDDEN, PATCH_DIM).T            # (C*P*P, hidden)

    # Fold conv bias and (zero) position embeddings into one small additive term,
    # pre-tiled over the batch so the kernel does a single fused epilogue add.
    additive = pos_emb.reshape(N_PATCH, HIDDEN) + b_conv[None, :]   # (16, 128)
    additive = jnp.tile(additive, (n, 1))                           # (32, 128), 16 KB

    out2d = pl.pallas_call(
        _embed_kernel,
        out_shape=jax.ShapeDtypeStruct((n * N_PATCH, HIDDEN), jnp.float32),
        compiler_params=pltpu.CompilerParams(
            # Let XLA fuse the im2col transpose / weight reshape / bias+pos add
            # into the kernel's inputs instead of materialising them in HBM.
            allow_input_fusion=[True, True, True]),
    )(patches, w_mat, additive)

    # Dropout(p=0.1) in inference (eval) mode is the identity.
    # TODO(synk): training-mode stochastic dropout (stateful RNG) not implemented.
    return out2d.reshape(n, N_PATCH, HIDDEN)


# ------------------------ pure-JAX reference (for checking) ------------------
def reference(x_nchw, w_conv, b_conv, pos_emb):
    y = lax.conv_general_dilated(
        x_nchw, w_conv, window_strides=(P, P), padding="VALID",
        dimension_numbers=("NCHW", "OIHW", "NCHW"),
        precision=lax.Precision.HIGHEST)                   # (N, hidden, nph, npw)
    y = y + b_conv[None, :, None, None]
    y = y.reshape(N, HIDDEN, N_PATCH).transpose(0, 2, 1)   # flatten(2).transpose(-1,-2)
    return y + pos_emb                                     # + position embeddings


if __name__ == "__main__":
    key = jax.random.PRNGKey(0)
    kx, kw, kb = jax.random.split(key, 3)

    x = jax.random.normal(kx, (N, C_IN, H, W), jnp.float32)

    # Deterministic Conv2d-style init (uniform in +/- 1/sqrt(fan_in)).
    fan_in = C_IN * P * P
    bound = 1.0 / float(np.sqrt(fan_in))
    w_conv = jax.random.uniform(kw, (HIDDEN, C_IN, P, P), jnp.float32, -bound, bound)
    b_conv = jax.random.uniform(kb, (HIDDEN,), jnp.float32, -bound, bound)
    pos_emb = jnp.zeros((1, N_PATCH, HIDDEN), jnp.float32)    # torch.zeros init

    out = embeddings_forward(x, w_conv, b_conv, pos_emb)
    out = jax.block_until_ready(out)

    ref = reference(x, w_conv, b_conv, pos_emb)
    np.testing.assert_allclose(np.asarray(out), np.asarray(ref), rtol=2e-4, atol=2e-4)
    print("KERNEL_OK")
</pallas_src>

<mosaic_0001>
module attributes {stable_mosaic.version = 11 : i64} {
  func.func @_embed_kernel(%arg0: memref<32x64xf32, #tpu.memory_space<vmem>>, %arg1: memref<64x128xf32, #tpu.memory_space<vmem>>, %arg2: memref<32x128xf32, #tpu.memory_space<vmem>>, %arg3: memref<32x128xf32, #tpu.memory_space<vmem>>) attributes {dimension_semantics = [], scalar_prefetch = 0 : i64, scratch_operands = 0 : i64, tpu.core_type = #tpu.core_type<tc>} {
    %c0 = arith.constant 0 : index
    %c0_0 = arith.constant 0 : index
    %0 = vector.load %arg0[%c0, %c0_0] : memref<32x64xf32, #tpu.memory_space<vmem>>, vector<32x64xf32>
    %c0_1 = arith.constant 0 : index
    %c0_2 = arith.constant 0 : index
    %1 = vector.load %arg1[%c0_1, %c0_2] : memref<64x128xf32, #tpu.memory_space<vmem>>, vector<64x128xf32>
    %cst = arith.constant dense<0.000000e+00> : vector<32x128xf32>
    %2 = tpu.matmul %0, %1, %cst {dimension_numbers = #tpu.dot_dimension_numbers<[1], [0], [0], [1], [0, 0, 1, 1], [], []>} : vector<32x64xf32>, vector<64x128xf32>, vector<32x128xf32> -> vector<32x128xf32>
    %c0_3 = arith.constant 0 : index
    %c0_4 = arith.constant 0 : index
    %3 = vector.load %arg2[%c0_3, %c0_4] : memref<32x128xf32, #tpu.memory_space<vmem>>, vector<32x128xf32>
    %4 = arith.addf %2, %3 : vector<32x128xf32>
    %c0_5 = arith.constant 0 : index
    %c0_6 = arith.constant 0 : index
    %5 = vector.load %arg3[%c0_5, %c0_6] : memref<32x128xf32, #tpu.memory_space<vmem>>, vector<32x128xf32>
    tpu.vector_store %arg3[%c0_5, %c0_6], %4 {strides = array<i32>} : memref<32x128xf32, #tpu.memory_space<vmem>>, vector<32x128xf32>,
    return
  }
}

</mosaic_0001>

<llo_original>
// kernel: embeddings_forward.1
$region0: #{embeddings_forward.1}
  #allocation0 [shape = 'u32[]', space=smem, size = 0x4, offset = 0x4, fixed_abs, tag = 'smem constant byte address 0x4 - core index']
  #allocation1 [shape = 'u32[144,128]{1,0:T(1,128)}', space=vmem, size = 0x12000, scoped, tag = 'internal scratch']
  %s0 = inlined_call_operand.vmem [shape: f32[32,64], index: 0, kind: input, shape index: {}]
  %s1 = inlined_call_operand.vmem [shape: f32[64,128], index: 1, kind: input, shape index: {}]
  %s2 = inlined_call_operand.vmem [shape: f32[32,128], index: 2, kind: input, shape index: {}]
  %s3 = inlined_call_operand.hbm [shape: f32[32,128], index: 3, kind: output, shape index: {}]
  %s4 = sld [smem:[#allocation0]]
  $region22: #{embeddings_forward.1} parent=0
    _
  %s6 = ssub.s32 1, %s4
  %s7 = scalar_select 0, %s6, %s4
  $region1: #{embeddings_forward.1} parent=0
    #allocation2 [shape = 'u8[16384]{0}', space=vmem, size = 0x4000, scoped, tag = 'output window, operand 0, single buffered']
    #allocation3 [shape = 's32[1]{0}', space=sflag, size = 0x4, scoped, tag = 'scoped memory for embeddings_forward.1']
    %8 = vsyncpa [#allocation3], 0
    // Predicated region
    $region2: #{embeddings_forward.1} parent=1 // pred_check
      _
    $region3: #{embeddings_forward.1} parent=1 // pred_check_branch
      %10 = sbr.rel (0) target = $region5
    $region4: #{embeddings_forward.1} parent=1 // pred_region
      _
    $region5: #{embeddings_forward.1} parent=1 // pred_fallthru
      _
    // Predicated region
    $region6: #{embeddings_forward.1} parent=1 // pred_check
      _
    $region7: #{embeddings_forward.1} parent=1 // pred_check_branch
      %12 = sbr.rel (0) target = $region9
    $region8: #{embeddings_forward.1} parent=1 // pred_region
      _
    $region9: #{embeddings_forward.1} parent=1 // pred_fallthru
      _
    // Predicated region
    $region10: #{embeddings_forward.1} parent=1 // pred_check
      _
    $region11: #{embeddings_forward.1} parent=1 // pred_check_branch
      %14 = sbr.rel (0) target = $region13
    $region12: #{embeddings_forward.1} parent=1 // pred_region
      _
    $region13: #{embeddings_forward.1} parent=1 // pred_fallthru
      _
    %v15 = vld [vmem:[%s0] sm:$0xff]
    %v16 = vld [vmem:[%s0 + $0x8] sm:$0xff]
    %v17 = vld [vmem:[%s0 + $0x10] sm:$0xff]
    %v18 = vld [vmem:[%s0 + $0x18] sm:$0xff]
    %v19 = vld [vmem:[%s1] sm:$0xff]
    %v20 = vld [vmem:[%s1 + $0x8] sm:$0xff]
    %v21 = vld [vmem:[%s1 + $0x10] sm:$0xff]
    %v22 = vld [vmem:[%s1 + $0x18] sm:$0xff]
    %v23 = vld [vmem:[%s1 + $0x20] sm:$0xff]
    %v24 = vld [vmem:[%s1 + $0x28] sm:$0xff]
    %v25 = vld [vmem:[%s1 + $0x30] sm:$0xff]
    %v26 = vld [vmem:[%s1 + $0x38] sm:$0xff]
    %v27 = vld [vmem:[%s2] sm:$0xff]
    %v28 = vld [vmem:[%s2 + $0x8] sm:$0xff]
    %v29 = vld [vmem:[%s2 + $0x10] sm:$0xff]
    %v30 = vld [vmem:[%s2 + $0x18] sm:$0xff]
    %vm31 = vcmask 523264
    %v33 = vsel %vm31, %v15, 0
    %v36 = vsel %vm31, %v16, 0
    %v39 = vsel %vm31, %v17, 0
    %v42 = vsel %vm31, %v18, 0
    %44 = vmatprep.subr.mxu0 0.0
    %45 = vmatpush1.msra.mxu0 %v19
    %46 = vmatprep.subr.mxu0 0.0
    %47 = vmatpush1.msra.mxu0 %v20
    %48 = vmatprep.subr.mxu0 0.0
    %49 = vmatpush1.msra.mxu0 %v21
    %50 = vmatprep.subr.mxu0 0.0
    %51 = vmatpush1.msra.mxu0 %v22
    %52 = vmatprep.subr.mxu0 0.0
    %53 = vmatpush1.msra.mxu0 %v23
    %54 = vmatprep.subr.mxu0 0.0
    %55 = vmatpush1.msra.mxu0 %v24
    %56 = vmatprep.subr.mxu0 0.0
    %57 = vmatpush1.msra.mxu0 %v25
    %58 = vmatprep.subr.mxu0 0.0
    %59 = vmatpush1.msra.mxu0 %v26
    %60 = vmatprep.subr.mxu0 0.0
    %61 = vmatpush1.msra.mxu0 0.0
    %62 = vmatprep.subr.mxu0 0.0
    %63 = vmatpush1.msra.mxu0 0.0
    %64 = vmatprep.subr.mxu0 0.0
    %65 = vmatpush1.msra.mxu0 0.0
    %66 = vmatprep.subr.mxu0 0.0
    %67 = vmatpush1.msra.mxu0 0.0
    %68 = vmatprep.subr.mxu0 0.0
    %69 = vmatpush1.msra.mxu0 0.0
    %70 = vmatprep.subr.mxu0 0.0
    %71 = vmatpush1.msra.mxu0 0.0
    %72 = vmatprep.subr.mxu0 0.0
    %73 = vmatpush1.msra.mxu0 0.0
    %74 = vmatprep.subr.mxu0 0.0
    %75 = vmatpush1.msra.mxu0 0.0
    %76 = vmatprep.subr.mxu0 0.0
    %77 = vmatpush1.msra.mxu0 0.0
    %78 = vmatprep.subr.mxu0 0.0
    %79 = vmatpush1.msra.mxu0 0.0
    %80 = vmatprep.subr.mxu0 0.0
    %81 = vmatpush1.msra.mxu0 0.0
    %82 = vmatprep.subr.mxu0 0.0
    %83 = vmatpush1.msra.mxu0 0.0
    %84 = vmatprep.subr.mxu0 0.0
    %85 = vmatpush1.msra.mxu0 0.0
    %86 = vmatprep.subr.mxu0 0.0
    %87 = vmatpush1.msra.mxu0 0.0
    %88 = vmatprep.subr.mxu0 0.0
    %89 = vmatpush1.msra.mxu0 0.0
    %90 = vmatprep.subr.mxu0 0.0
    %91 = vmatpush1.msra.mxu0 0.0
    %92 = vmatprep.subr.mxu0 0.0
    %93 = vmatpush1.msra.mxu0 0.0
    %94 = vmatprep.subr.mxu0 0.0
    %95 = vmatpush1.msra.mxu0 0.0
    %96 = vmatprep.subr.mxu0 0.0
    %97 = vmatpush1.msra.mxu0 0.0
    %98 = vmatprep.subr.mxu0 0.0
    %99 = vmatpush1.msra.mxu0 0.0
    %100 = vmatprep.subr.mxu0 0.0
    %101 = vmatpush1.msra.mxu0 0.0
    %102 = vmatprep.subr.mxu0 0.0
    %103 = vmatpush1.msra.mxu0 0.0
    %104 = vmatprep.subr.mxu0 0.0
    %105 = vmatpush1.msra.mxu0 0.0
    %106 = vmatprep.subr.mxu0 0.0
    %107 = vmatpush1.msra.mxu0 0.0
    %108 = vmatprep.mubr.f32.mxu0 0.0
    %109 = vmatmul.mubr.f32.gmra.mrb[0].mxu0 %v33
    %v110 = vpop.f32.mrb[0].mxu0
    %v111 = vadd.f32 %v27, %v110
    %v112 = vpop.f32.mrb[0].mxu0
    %113 = vmatprep.mubr.f32.mxu0 0.0
    %114 = vmatmul.mubr.f32.gmra.mrb[0].mxu0 %v36
    %v115 = vpop.f32.mrb[0].mxu0
    %v116 = vadd.f32 %v28, %v115
    %v117 = vpop.f32.mrb[0].mxu0
    %118 = vmatprep.mubr.f32.mxu0 0.0
    %119 = vmatmul.mubr.f32.gmra.mrb[0].mxu0 %v39
    %v120 = vpop.f32.mrb[0].mxu0
    %v121 = vadd.f32 %v29, %v120
    %v122 = vpop.f32.mrb[0].mxu0
    %123 = vmatprep.mubr.f32.mxu0 0.0
    %124 = vmatmul.mubr.f32.gmra.mrb[0].mxu0 %v42
    %v125 = vpop.f32.mrb[0].mxu0
    %v126 = vadd.f32 %v30, %v125
    %v127 = vpop.f32.mrb[0].mxu0
    %128 = vdwg.mxu0
    %129 = vst [vmem:[#allocation2] sm:$0xff] %v111
    %130 = vst [vmem:[#allocation2 + $0x8] sm:$0xff] %v116
    %131 = vst [vmem:[#allocation2 + $0x10] sm:$0xff] %v121
    %132 = vst [vmem:[#allocation2 + $0x18] sm:$0xff] %v126
    // Predicated region
    $region14: #{embeddings_forward.1} parent=1 // pred_check
      _
    $region15: #{embeddings_forward.1} parent=1 // pred_check_branch
      %134 = sbr.rel (0) target = $region17
    $region16: #{embeddings_forward.1} parent=1 // pred_region
      %s136 = ssub.s32 512, 512
      %137 = vsyncadd [#allocation3], %s136
      %s138 = sshll.u32 [#allocation2], 4
      %s139 = int_to_ptr.vmem [resolvable:$true] %s138
      %144 = dma.vmem_to_hbm [thread:$0]  %s139, 512, %s3, [#allocation3], 128, 128, 8
    $region17: #{embeddings_forward.1} parent=1 // pred_fallthru
      _
    // Predicated region
    $region18: #{embeddings_forward.1} parent=1 // pred_check
      _
    $region19: #{embeddings_forward.1} parent=1 // pred_check_branch
      %146 = sbr.rel (0) target = $region21
    $region20: #{embeddings_forward.1} parent=1 // pred_region
      %147 = dma.done [#allocation3], 512
    $region21: #{embeddings_forward.1} parent=1 // pred_fallthru
      _
    %148 = vsyncpa [#allocation3], 1

</llo_original>
